<compile_context>
chip_gen: v6e
topology: v6e:2x2x1
jax: 0.10.0
libtpu: 0.0.40
codegen_flags: <defaults>
</compile_context>

<pallas_src>
import functools

import numpy as np
import jax
import jax.numpy as jnp
from jax.experimental import pallas as pl
from jax.experimental.pallas import tpu as pltpu

LANE = 128           # TPU lane width; parameter slabs are zero-padded to this.
_LP = 123            # h1 lane carrying relu(+action)
_LN = 124            # h1 lane carrying relu(-action)
_L1 = 125            # h1 lane carrying the constant 1 (injects b2 into layer 2)
_LQ = 127            # h2 lane carrying the constant 1 (injects b3 into layer 3)

BIAS_FINAL_INIT = 0.0003
WEIGHTS_FINAL_INIT = 0.003


def _round_up(x, m):
    return ((x + m - 1) // m) * m


# ----------------------------- Pallas kernel ------------------------------- #
def _critic_kernel(aug_ref, w_ref, out_ref, *, k_pad):
    aug = aug_ref[...]                                  # (tb, k_pad)

    # Static, sublane-aligned views into the packed parameter slab (no copies).
    w1 = w_ref[0:k_pad, :]                              # (k_pad, 128) layer-1 block
    w2 = w_ref[k_pad:k_pad + LANE, :]                   # (128, 128)   layer-2 block
    w3 = w_ref[k_pad + LANE:k_pad + LANE + 8, :]        # (8, 128)     layer-3 block (row 0 real)

    # Layer 1 + ReLU (MXU).  Bias, action carry-lanes and the constant-1 lane are
    # all baked into w1; padded lanes stay exactly 0 through the ReLU.
    x1 = jnp.maximum(jnp.dot(aug, w1, preferred_element_type=jnp.float32), 0.0)

    # Layer 2 on cat([h1, action]) + bias + ReLU, as a single MXU matmul:
    # rows _LP/_LN of w2 hold +/- w2b (so relu(a)-relu(-a) contributes a*w2b),
    # row _L1 holds b2 and the 1.0 that keeps lane _LQ == 1 for the b3 fold.
    x2 = jnp.maximum(jnp.dot(x1, w2, preferred_element_type=jnp.float32), 0.0)

    # Layer 3 (+ b3 via lane _LQ), produced lane-dense: contract the 128-lane
    # feature axis of x2 against the W3 row -> (8, tb); row 0 is q^T.
    q8 = jax.lax.dot_general(w3, x2, (((1,), (1,)), ((), ())),
                             preferred_element_type=jnp.float32)
    out_ref[...] = q8[0:1, :]                           # (1, tb) unmasked store


def critic_forward(state, action, w_slab, *, block_b=1024):
    """Fused Critic forward.  `w_slab` comes from pack_critic_params."""
    B, input_size = state.shape
    k_pad = _round_up(input_size + 2, 8)                # state | action | 1 | zero pad
    assert w_slab.shape == (k_pad + LANE + 8, LANE), "slab/input size mismatch"

    tb = min(block_b, B)                                # default: whole batch, grid=(1,)
    assert B % tb == 0, "batch must be a multiple of the batch tile"
    assert tb == B or tb % 128 == 0, "lane-dense output tile must be 128-aligned"

    pad = k_pad - (input_size + 2)
    aug = jnp.concatenate(
        [state.astype(jnp.float32),
         action[:, :1].astype(jnp.float32),
         jnp.ones((B, 1), jnp.float32),                 # constant-1 column -> biases
         jnp.zeros((B, pad), jnp.float32)],
        axis=1)                                         # (B, k_pad), one contiguous DMA

    kernel = functools.partial(_critic_kernel, k_pad=k_pad)

    out = pl.pallas_call(
        kernel,
        out_shape=jax.ShapeDtypeStruct((1, B), jnp.float32),   # lane-dense q row
        grid_spec=pltpu.PrefetchScalarGridSpec(
            num_scalar_prefetch=0,
            grid=(B // tb,),                                    # 1 step for small B
            in_specs=[
                pl.BlockSpec((tb, k_pad), lambda i: (i, 0)),    # augmented state tile
                pl.BlockSpec(w_slab.shape, lambda i: (0, 0)),   # params: fetched once
            ],
            out_specs=pl.BlockSpec((1, tb), lambda i: (0, i)),  # dense lane chunk
        ),
        # Overhead-bound at these sizes: do NOT shard a ~us kernel across cores.
        compiler_params=pltpu.CompilerParams(
            dimension_semantics=("arbitrary",)),
    )(aug, w_slab)
    return out.reshape(B, 1)                            # (1,B) -> (B,1) is free


# --------------------------- parameter creation ----------------------------- #
def _fan_in_uniform(key, shape, fan_in):
    w = 1.0 / np.sqrt(fan_in)
    return jax.random.uniform(key, shape, jnp.float32, minval=-w, maxval=w)


def make_critic_params(key, input_size, hidden_size, output_size, action_dim):
    """Init mirroring the PyTorch module (weights stored as (in, out) = W^T).

    fan_in_uniform_init uses tensor.size(-1): in_features for weights,
    out_features for biases (DDPG convention, matching the reference module)."""
    h0, h1 = hidden_size
    k = jax.random.split(key, 6)
    w1 = _fan_in_uniform(k[0], (input_size, h0), fan_in=input_size)
    b1 = _fan_in_uniform(k[1], (1, h0), fan_in=h0)
    w2 = _fan_in_uniform(k[2], (h0 + action_dim, h1), fan_in=h0 + action_dim)
    b2 = _fan_in_uniform(k[3], (1, h1), fan_in=h1)
    w3 = jax.random.uniform(k[4], (h1, output_size), jnp.float32,
                            minval=-WEIGHTS_FINAL_INIT, maxval=WEIGHTS_FINAL_INIT)
    b3 = jax.random.uniform(k[5], (1, output_size), jnp.float32,
                            minval=-BIAS_FINAL_INIT, maxval=BIAS_FINAL_INIT)
    return w1, b1, w2, b2, w3, b3


def pack_critic_params(params, input_size, hidden_size, action_dim):
    """Pack all 6 tensors into ONE lane-aligned slab; biases/action/b3 folded in."""
    w1, b1, w2, b2, w3, b3 = params
    hidden0, hidden1 = hidden_size
    assert action_dim == 1 and w3.shape[1] == 1, (
        "packed kernel assumes action_dim == 1 and output_size == 1")
    assert hidden0 <= _LP and hidden1 < _LQ, (
        "hidden sizes must leave the carry lanes 123..127 free")
    # TODO(synk): generalize packing for action_dim > 1 / output_size > 1 / hidden > 123.

    k_pad = _round_up(input_size + 2, 8)
    a_col = input_size            # augmented-input column holding the action
    one_col = input_size + 1      # augmented-input column holding the constant 1

    w2a = np.asarray(w2)[:hidden0, :]     # state part of linear2 weight (hidden0, hidden1)
    w2b = np.asarray(w2)[hidden0, :]      # action row of linear2 weight (hidden1,)

    slab = np.zeros((k_pad + LANE + 8, LANE), np.float32)

    # Layer-1 block: rows [0, k_pad)
    slab[0:input_size, 0:hidden0] = np.asarray(w1)
    slab[one_col, 0:hidden0] = np.asarray(b1)[0]        # const-1 column -> +b1
    slab[a_col, _LP] = 1.0                              # h1[:,_LP] = relu(+a)
    slab[a_col, _LN] = -1.0                             # h1[:,_LN] = relu(-a)
    slab[one_col, _L1] = 1.0                            # h1[:,_L1] = 1.0 (carries bias)

    # Layer-2 block: rows [k_pad, k_pad+128)
    r2 = k_pad
    slab[r2:r2 + hidden0, 0:hidden1] = w2a
    slab[r2 + _LP, 0:hidden1] = w2b                     # relu(+a) branch
    slab[r2 + _LN, 0:hidden1] = -w2b                    # relu(-a) branch; sum == a*w2b
    slab[r2 + _L1, 0:hidden1] = np.asarray(b2)[0]       # carry lane -> +b2
    slab[r2 + _L1, _LQ] = 1.0                           # h2[:,_LQ] = 1.0 (carries b3)

    # Layer-3 block: rows [k_pad+128, k_pad+136); only row 0 is real
    r3 = k_pad + LANE
    slab[r3, 0:hidden1] = np.asarray(w3)[:, 0]
    slab[r3, _LQ] = float(np.asarray(b3)[0, 0])         # carry lane -> +b3

    return jnp.asarray(slab)


# ------------------------------- reference ---------------------------------- #
def critic_reference(state, action, params):
    w1, b1, w2, b2, w3, b3 = params
    x = jnp.maximum(state @ w1 + b1, 0.0)
    x = jnp.concatenate([x, action], axis=1)
    x = jnp.maximum(x @ w2 + b2, 0.0)
    return x @ w3 + b3


# --------------------------------- main -------------------------------------- #
if __name__ == "__main__":
    input_size = 16
    hidden_size = (32, 32)
    output_size = 1
    action_dim = 1
    B = 256                 # batch large enough to amortize per-call overhead

    key = jax.random.PRNGKey(0)
    k_params, k_state, k_action = jax.random.split(key, 3)

    params = make_critic_params(k_params, input_size, hidden_size,
                                output_size, action_dim)
    w_slab = pack_critic_params(params, input_size, hidden_size, action_dim)

    state = jax.random.normal(k_state, (B, input_size), jnp.float32)
    action = jax.random.normal(k_action, (B, action_dim), jnp.float32)

    out = critic_forward(state, action, w_slab)
    out = jax.block_until_ready(out)

    ref = critic_reference(state, action, params)
    np.testing.assert_allclose(np.asarray(out), np.asarray(ref),
                               rtol=1e-5, atol=1e-5)

    print("KERNEL_OK")
</pallas_src>

<mosaic_0001>
module attributes {stable_mosaic.version = 11 : i64} {
  func.func @_critic_kernel(%arg0: i32, %arg1: memref<256x24xf32, #tpu.memory_space<vmem>>, %arg2: memref<160x128xf32, #tpu.memory_space<vmem>>, %arg3: memref<1x256xf32, #tpu.memory_space<vmem>>) attributes {dimension_semantics = [#tpu.dimension_semantics<arbitrary>], iteration_bounds = array<i64: 1>, scalar_prefetch = 0 : i64, scratch_operands = 0 : i64, tpu.core_type = #tpu.core_type<tc>, window_params = [{transform_indices = @transform_0, window_bounds = array<i64: 256, 24>}, {pipeline_mode = #tpu.pipeline_mode<synchronous>, transform_indices = @transform_1, window_bounds = array<i64: 160, 128>}, {transform_indices = @transform_2, window_bounds = array<i64: 1, 256>}]} {
    %c0 = arith.constant 0 : index
    %c0_0 = arith.constant 0 : index
    %0 = vector.load %arg1[%c0, %c0_0] : memref<256x24xf32, #tpu.memory_space<vmem>>, vector<256x24xf32>
    %c0_1 = arith.constant 0 : index
    %c0_2 = arith.constant 0 : index
    %1 = vector.load %arg2[%c0_1, %c0_2] : memref<160x128xf32, #tpu.memory_space<vmem>>, vector<24x128xf32>
    %c24 = arith.constant 24 : index
    %c0_3 = arith.constant 0 : index
    %2 = vector.load %arg2[%c24, %c0_3] : memref<160x128xf32, #tpu.memory_space<vmem>>, vector<128x128xf32>
    %c152 = arith.constant 152 : index
    %c0_4 = arith.constant 0 : index
    %3 = vector.load %arg2[%c152, %c0_4] : memref<160x128xf32, #tpu.memory_space<vmem>>, vector<8x128xf32>
    %cst = arith.constant dense<0.000000e+00> : vector<256x128xf32>
    %4 = tpu.matmul %0, %1, %cst {dimension_numbers = #tpu.dot_dimension_numbers<[1], [0], [0], [1], [0, 0, 1, 1], [], []>} : vector<256x24xf32>, vector<24x128xf32>, vector<256x128xf32> -> vector<256x128xf32>
    %cst_5 = arith.constant 0.000000e+00 : f32
    %5 = vector.broadcast %cst_5 : f32 to vector<256x128xf32>
    %6 = arith.maximumf %4, %5 : vector<256x128xf32>
    %cst_6 = arith.constant dense<0.000000e+00> : vector<256x128xf32>
    %7 = tpu.matmul %6, %2, %cst_6 {dimension_numbers = #tpu.dot_dimension_numbers<[1], [0], [0], [1], [0, 0, 1, 1], [], []>} : vector<256x128xf32>, vector<128x128xf32>, vector<256x128xf32> -> vector<256x128xf32>
    %cst_7 = arith.constant 0.000000e+00 : f32
    %8 = vector.broadcast %cst_7 : f32 to vector<256x128xf32>
    %9 = arith.maximumf %7, %8 : vector<256x128xf32>
    %cst_8 = arith.constant dense<0.000000e+00> : vector<8x256xf32>
    %10 = tpu.matmul %3, %9, %cst_8 {dimension_numbers = #tpu.dot_dimension_numbers<[1], [1], [0], [0], [0, 0, 1, 0], [], []>} : vector<8x128xf32>, vector<256x128xf32>, vector<8x256xf32> -> vector<8x256xf32>
    %11 = vector.extract_strided_slice %10 {offsets = [0, 0], sizes = [1, 256], strides = [1, 1]} : vector<8x256xf32> to vector<1x256xf32>
    %c0_9 = arith.constant 0 : index
    %c0_10 = arith.constant 0 : index
    %12 = vector.load %arg3[%c0_9, %c0_10] : memref<1x256xf32, #tpu.memory_space<vmem>>, vector<1x256xf32>
    tpu.vector_store %arg3[%c0_9, %c0_10], %11 {strides = array<i32>} : memref<1x256xf32, #tpu.memory_space<vmem>>, vector<1x256xf32>,
    return
  }
  func.func @transform_0(%arg0: i32) -> (i32, i32) {
    %c0_i32 = arith.constant 0 : i32
    %c0_i32_0 = arith.constant 0 : i32
    return %arg0, %c0_i32 : i32, i32
  }
  func.func @transform_1(%arg0: i32) -> (i32, i32) {
    %c0_i32 = arith.constant 0 : i32
    %c0_i32_0 = arith.constant 0 : i32
    %c0_i32_1 = arith.constant 0 : i32
    return %c0_i32, %c0_i32_0 : i32, i32
  }
  func.func @transform_2(%arg0: i32) -> (i32, i32) {
    %c0_i32 = arith.constant 0 : i32
    %c0_i32_0 = arith.constant 0 : i32
    return %c0_i32, %arg0 : i32, i32
  }
}

</mosaic_0001>

<llo_original>
// kernel: tpu_custom_call.1
$region0: #{tpu_custom_call.1}
  #allocation0 [shape = 'u32[]', space=smem, size = 0x4, offset = 0x4, fixed_abs, tag = 'smem constant byte address 0x4 - core index']
  #allocation1 [shape = 'u32[144,128]{1,0:T(1,128)}', space=vmem, size = 0x12000, scoped, tag = 'internal scratch']
  %s0 = inlined_call_operand.vmem [shape: f32[256,24], index: 0, kind: input, shape index: {}]
  %s1 = inlined_call_operand.vmem [shape: f32[160,128], index: 1, kind: input, shape index: {}]
  %s2 = inlined_call_operand.hbm [shape: f32[1,256], index: 2, kind: output, shape index: {}]
  %s3 = sld [smem:[#allocation0]]
  $region18: #{tpu_custom_call.1} parent=0
    _
  %s5 = ssub.s32 1, %s3
  %s6 = scalar_select 0, %s5, %s3
  $region1: #{tpu_custom_call.1} parent=0
    #allocation2 [shape = 'u8[1024]{0}', space=vmem, size = 0x400, scoped, tag = 'output window, operand 0, single buffered']
    #allocation3 [shape = 's32[1]{0}', space=sflag, size = 0x4, scoped, tag = 'scoped memory for tpu_custom_call.1']
    %7 = vsyncpa [#allocation3], 0
    // Predicated region
    $region2: #{tpu_custom_call.1} parent=1 // pred_check
      _
    $region3: #{tpu_custom_call.1} parent=1 // pred_check_branch
      %9 = sbr.rel (0) target = $region5
    $region4: #{tpu_custom_call.1} parent=1 // pred_region
      _
    $region5: #{tpu_custom_call.1} parent=1 // pred_fallthru
      _
    // Predicated region
    $region6: #{tpu_custom_call.1} parent=1 // pred_check
      _
    $region7: #{tpu_custom_call.1} parent=1 // pred_check_branch
      %11 = sbr.rel (0) target = $region9
    $region8: #{tpu_custom_call.1} parent=1 // pred_region
      _
    $region9: #{tpu_custom_call.1} parent=1 // pred_fallthru
      _
    %v12 = vld [vmem:[%s0] sm:$0xff]
    %v13 = vld [vmem:[%s0 + $0x8] sm:$0xff]
    %v14 = vld [vmem:[%s0 + $0x10] sm:$0xff]
    %v15 = vld [vmem:[%s0 + $0x18] sm:$0xff]
    %v16 = vld [vmem:[%s0 + $0x20] sm:$0xff]
    %v17 = vld [vmem:[%s0 + $0x28] sm:$0xff]
    %v18 = vld [vmem:[%s0 + $0x30] sm:$0xff]
    %v19 = vld [vmem:[%s0 + $0x38] sm:$0xff]
    %v20 = vld [vmem:[%s0 + $0x40] sm:$0xff]
    %v21 = vld [vmem:[%s0 + $0x48] sm:$0xff]
    %v22 = vld [vmem:[%s0 + $0x50] sm:$0xff]
    %v23 = vld [vmem:[%s0 + $0x58] sm:$0xff]
    %v24 = vld [vmem:[%s0 + $0x60] sm:$0xff]
    %v25 = vld [vmem:[%s0 + $0x68] sm:$0xff]
    %v26 = vld [vmem:[%s0 + $0x70] sm:$0xff]
    %v27 = vld [vmem:[%s0 + $0x78] sm:$0xff]
    %v28 = vld [vmem:[%s0 + $0x80] sm:$0xff]
    %v29 = vld [vmem:[%s0 + $0x88] sm:$0xff]
    %v30 = vld [vmem:[%s0 + $0x90] sm:$0xff]
    %v31 = vld [vmem:[%s0 + $0x98] sm:$0xff]
    %v32 = vld [vmem:[%s0 + $0xa0] sm:$0xff]
    %v33 = vld [vmem:[%s0 + $0xa8] sm:$0xff]
    %v34 = vld [vmem:[%s0 + $0xb0] sm:$0xff]
    %v35 = vld [vmem:[%s0 + $0xb8] sm:$0xff]
    %v36 = vld [vmem:[%s0 + $0xc0] sm:$0xff]
    %v37 = vld [vmem:[%s0 + $0xc8] sm:$0xff]
    %v38 = vld [vmem:[%s0 + $0xd0] sm:$0xff]
    %v39 = vld [vmem:[%s0 + $0xd8] sm:$0xff]
    %v40 = vld [vmem:[%s0 + $0xe0] sm:$0xff]
    %v41 = vld [vmem:[%s0 + $0xe8] sm:$0xff]
    %v42 = vld [vmem:[%s0 + $0xf0] sm:$0xff]
    %v43 = vld [vmem:[%s0 + $0xf8] sm:$0xff]
    %v44 = vld [vmem:[%s1] sm:$0xff]
    %v45 = vld [vmem:[%s1 + $0x8] sm:$0xff]
    %v46 = vld [vmem:[%s1 + $0x10] sm:$0xff]
    %v47 = vld [vmem:[%s1 + $0x18] sm:$0xff]
    %v48 = vld [vmem:[%s1 + $0x20] sm:$0xff]
    %v49 = vld [vmem:[%s1 + $0x28] sm:$0xff]
    %v50 = vld [vmem:[%s1 + $0x30] sm:$0xff]
    %v51 = vld [vmem:[%s1 + $0x38] sm:$0xff]
    %v52 = vld [vmem:[%s1 + $0x40] sm:$0xff]
    %v53 = vld [vmem:[%s1 + $0x48] sm:$0xff]
    %v54 = vld [vmem:[%s1 + $0x50] sm:$0xff]
    %v55 = vld [vmem:[%s1 + $0x58] sm:$0xff]
    %v56 = vld [vmem:[%s1 + $0x60] sm:$0xff]
    %v57 = vld [vmem:[%s1 + $0x68] sm:$0xff]
    %v58 = vld [vmem:[%s1 + $0x70] sm:$0xff]
    %v59 = vld [vmem:[%s1 + $0x78] sm:$0xff]
    %v60 = vld [vmem:[%s1 + $0x80] sm:$0xff]
    %v61 = vld [vmem:[%s1 + $0x88] sm:$0xff]
    %v62 = vld [vmem:[%s1 + $0x90] sm:$0xff]
    %v63 = vld [vmem:[%s1 + $0x98] sm:$0xff]
    %vm64 = vcmask 195584
    %v66 = vsel %vm64, %v12, 0
    %v69 = vsel %vm64, %v13, 0
    %v72 = vsel %vm64, %v14, 0
    %v75 = vsel %vm64, %v15, 0
    %v78 = vsel %vm64, %v16, 0
    %v81 = vsel %vm64, %v17, 0
    %v84 = vsel %vm64, %v18, 0
    %v87 = vsel %vm64, %v19, 0
    %v90 = vsel %vm64, %v20, 0
    %v93 = vsel %vm64, %v21, 0
    %v96 = vsel %vm64, %v22, 0
    %v99 = vsel %vm64, %v23, 0
    %v102 = vsel %vm64, %v24, 0
    %v105 = vsel %vm64, %v25, 0
    %v108 = vsel %vm64, %v26, 0
    %v111 = vsel %vm64, %v27, 0
    %v114 = vsel %vm64, %v28, 0
    %v117 = vsel %vm64, %v29, 0
    %v120 = vsel %vm64, %v30, 0
    %v123 = vsel %vm64, %v31, 0
    %v126 = vsel %vm64, %v32, 0
    %v129 = vsel %vm64, %v33, 0
    %v132 = vsel %vm64, %v34, 0
    %v135 = vsel %vm64, %v35, 0
    %v138 = vsel %vm64, %v36, 0
    %v141 = vsel %vm64, %v37, 0
    %v144 = vsel %vm64, %v38, 0
    %v147 = vsel %vm64, %v39, 0
    %v150 = vsel %vm64, %v40, 0
    %v153 = vsel %vm64, %v41, 0
    %v156 = vsel %vm64, %v42, 0
    %v159 = vsel %vm64, %v43, 0
    %161 = vmatprep.subr.mxu0 0.0
    %162 = vmatpush1.msra.mxu0 0.0
    %163 = vmatprep.subr.mxu0 0.0
    %164 = vmatpush1.msra.mxu0 0.0
    %165 = vmatprep.subr.mxu0 0.0
    %166 = vmatpush1.msra.mxu0 0.0
    %167 = vmatprep.subr.mxu0 0.0
    %168 = vmatpush1.msra.mxu0 0.0
    %169 = vmatprep.subr.mxu0 0.0
    %170 = vmatpush1.msra.mxu0 0.0
    %171 = vmatprep.subr.mxu0 0.0
    %172 = vmatpush1.msra.mxu0 0.0
    %173 = vmatprep.subr.mxu0 0.0
    %174 = vmatpush1.msra.mxu0 0.0
    %175 = vmatprep.subr.mxu0 0.0
    %176 = vmatpush1.msra.mxu0 0.0
    %177 = vmatprep.subr.mxu0 0.0
    %178 = vmatpush1.msra.mxu0 0.0
    %179 = vmatprep.subr.mxu0 0.0
    %180 = vmatpush1.msra.mxu0 0.0
    %181 = vmatprep.subr.mxu0 0.0
    %182 = vmatpush1.msra.mxu0 0.0
    %183 = vmatprep.subr.mxu0 0.0
    %184 = vmatpush1.msra.mxu0 0.0
    %185 = vmatprep.subr.mxu0 0.0
    %186 = vmatpush1.msra.mxu0 0.0
    %187 = vmatprep.subr.mxu0 0.0
    %188 = vmatpush1.msra.mxu0 %v46
    %189 = vmatprep.subr.mxu0 0.0
    %190 = vmatpush1.msra.mxu0 %v45
    %191 = vmatprep.subr.mxu0 0.0
    %192 = vmatpush1.msra.mxu0 %v44
    %193 = vmatprep.subr.mxu0 0.0
    %194 = vmatpush2.msra.mxu0 0.0
    %195 = vmatprep.subr.mxu0 0.0
    %196 = vmatpush2.msra.mxu0 0.0
    %197 = vmatprep.subr.mxu0 0.0
    %198 = vmatpush2.msra.mxu0 0.0
    %199 = vmatprep.subr.mxu0 0.0
    %200 = vmatpush2.msra.mxu0 0.0
    %201 = vmatprep.subr.mxu0 0.0
    %202 = vmatpush2.msra.mxu0 0.0
    %203 = vmatprep.subr.mxu0 0.0
    %204 = vmatpush2.msra.mxu0 0.0
    %205 = vmatprep.subr.mxu0 0.0
    %206 = vmatpush2.msra.mxu0 0.0
    %207 = vmatprep.subr.mxu0 0.0
    %208 = vmatpush2.msra.mxu0 0.0
    %209 = vmatprep.subr.mxu0 0.0
    %210 = vmatpush2.msra.mxu0 0.0
    %211 = vmatprep.subr.mxu0 0.0
    %212 = vmatpush2.msra.mxu0 0.0
    %213 = vmatprep.subr.mxu0 0.0
    %214 = vmatpush2.msra.mxu0 0.0
    %215 = vmatprep.subr.mxu0 0.0
    %216 = vmatpush2.msra.mxu0 0.0
    %217 = vmatprep.subr.mxu0 0.0
    %218 = vmatpush2.msra.mxu0 0.0
    %219 = vmatprep.subr.mxu0 0.0
    %220 = vmatpush2.msra.mxu0 0.0
    %221 = vmatprep.subr.mxu0 0.0
    %222 = vmatpush2.msra.mxu0 0.0
    %223 = vmatprep.subr.mxu0 0.0
    %224 = vmatpush2.msra.mxu0 0.0
    %225 = vmatprep.mubr.f32.mxu0 0.0
    %226 = vmatmul.mubr.f32.gmra.mxu0 %v66
    %v227 = vpop.f32.mrf.mxu0
    %v228 = vadd.f32 0.0, %v227
    %v229 = vpop.f32.mrf.mxu0
    %230 = vmatprep.mubr.f32.mxu0 0.0
    %231 = vmatmul.mubr.f32.gmra.mxu0 %v69
    %v232 = vpop.f32.mrf.mxu0
    %v233 = vadd.f32 0.0, %v232
    %v234 = vpop.f32.mrf.mxu0
    %235 = vmatprep.mubr.f32.mxu0 0.0
    %236 = vmatmul.mubr.f32.gmra.mxu0 %v72
    %v237 = vpop.f32.mrf.mxu0
    %v238 = vadd.f32 0.0, %v237
    %v239 = vpop.f32.mrf.mxu0
    %240 = vmatprep.mubr.f32.mxu0 0.0
    %241 = vmatmul.mubr.f32.gmra.mxu0 %v75
    %v242 = vpop.f32.mrf.mxu0
    %v243 = vadd.f32 0.0, %v242
    %v244 = vpop.f32.mrf.mxu0
    %245 = vmatprep.mubr.f32.mxu0 0.0
    %246 = vmatmul.mubr.f32.gmra.mxu0 %v78
    %v247 = vpop.f32.mrf.mxu0
    %v248 = vadd.f32 0.0, %v247
    %v249 = vpop.f32.mrf.mxu0
    %250 = vmatprep.mubr.f32.mxu0 0.0
    %251 = vmatmul.mubr.f32.gmra.mxu0 %v81
    %v252 = vpop.f32.mrf.mxu0
    %v253 = vadd.f32 0.0, %v252
    %v254 = vpop.f32.mrf.mxu0
    %255 = vmatprep.mubr.f32.mxu0 0.0
    %256 = vmatmul.mubr.f32.gmra.mxu0 %v84
    %v257 = vpop.f32.mrf.mxu0
    %v258 = vadd.f32 0.0, %v257
    %v259 = vpop.f32.mrf.mxu0
    %260 = vmatprep.mubr.f32.mxu0 0.0
    %261 = vmatmul.mubr.f32.gmra.mxu0 %v87
    %v262 = vpop.f32.mrf.mxu0
    %v263 = vadd.f32 0.0, %v262
    %v264 = vpop.f32.mrf.mxu0
    %265 = vmatprep.mubr.f32.mxu0 0.0
    %266 = vmatmul.mubr.f32.gmra.mxu0 %v90
    %v267 = vpop.f32.mrf.mxu0
    %v268 = vadd.f32 0.0, %v267
    %v269 = vpop.f32.mrf.mxu0
    %270 = vmatprep.mubr.f32.mxu0 0.0
    %271 = vmatmul.mubr.f32.gmra.mxu0 %v93
    %v272 = vpop.f32.mrf.mxu0
    %v273 = vadd.f32 0.0, %v272
    %v274 = vpop.f32.mrf.mxu0
    %275 = vmatprep.mubr.f32.mxu0 0.0
    %276 = vmatmul.mubr.f32.gmra.mxu0 %v96
    %v277 = vpop.f32.mrf.mxu0
    %v278 = vadd.f32 0.0, %v277
    %v279 = vpop.f32.mrf.mxu0
    %280 = vmatprep.mubr.f32.mxu0 0.0
    %281 = vmatmul.mubr.f32.gmra.mxu0 %v99
    %v282 = vpop.f32.mrf.mxu0
    %v283 = vadd.f32 0.0, %v282
    %v284 = vpop.f32.mrf.mxu0
    %285 = vmatprep.mubr.f32.mxu0 0.0
    %286 = vmatmul.mubr.f32.gmra.mxu0 %v102
    %v287 = vpop.f32.mrf.mxu0
    %v288 = vadd.f32 0.0, %v287
    %v289 = vpop.f32.mrf.mxu0
    %290 = vmatprep.mubr.f32.mxu0 0.0
    %291 = vmatmul.mubr.f32.gmra.mxu0 %v105
    %v292 = vpop.f32.mrf.mxu0
    %v293 = vadd.f32 0.0, %v292
    %v294 = vpop.f32.mrf.mxu0
    %295 = vmatprep.mubr.f32.mxu0 0.0
    %296 = vmatmul.mubr.f32.gmra.mxu0 %v108
    %v297 = vpop.f32.mrf.mxu0
    %v298 = vadd.f32 0.0, %v297
    %v299 = vpop.f32.mrf.mxu0
    %300 = vmatprep.mubr.f32.mxu0 0.0
    %301 = vmatmul.mubr.f32.gmra.mxu0 %v111
    %v302 = vpop.f32.mrf.mxu0
    %v303 = vadd.f32 0.0, %v302
    %v304 = vpop.f32.mrf.mxu0
    %305 = vmatprep.mubr.f32.mxu0 0.0
    %306 = vmatmul.mubr.f32.gmra.mxu0 %v114
    %v307 = vpop.f32.mrf.mxu0
    %v308 = vadd.f32 0.0, %v307
    %v309 = vpop.f32.mrf.mxu0
    %310 = vmatprep.mubr.f32.mxu0 0.0
    %311 = vmatmul.mubr.f32.gmra.mxu0 %v117
    %v312 = vpop.f32.mrf.mxu0
    %v313 = vadd.f32 0.0, %v312
    %v314 = vpop.f32.mrf.mxu0
    %315 = vmatprep.mubr.f32.mxu0 0.0
    %316 = vmatmul.mubr.f32.gmra.mxu0 %v120
    %v317 = vpop.f32.mrf.mxu0
    %v318 = vadd.f32 0.0, %v317
    %v319 = vpop.f32.mrf.mxu0
    %320 = vmatprep.mubr.f32.mxu0 0.0
    %321 = vmatmul.mubr.f32.gmra.mxu0 %v123
    %v322 = vpop.f32.mrf.mxu0
    %v323 = vadd.f32 0.0, %v322
    %v324 = vpop.f32.mrf.mxu0
    %325 = vmatprep.mubr.f32.mxu0 0.0
    %326 = vmatmul.mubr.f32.gmra.mxu0 %v126
    %v327 = vpop.f32.mrf.mxu0
    %v328 = vadd.f32 0.0, %v327
    %v329 = vpop.f32.mrf.mxu0
    %330 = vmatprep.mubr.f32.mxu0 0.0
    %331 = vmatmul.mubr.f32.gmra.mxu0 %v129
    %v332 = vpop.f32.mrf.mxu0
    %v333 = vadd.f32 0.0, %v332
    %v334 = vpop.f32.mrf.mxu0
    %335 = vmatprep.mubr.f32.mxu0 0.0
    %336 = vmatmul.mubr.f32.gmra.mxu0 %v132
    %v337 = vpop.f32.mrf.mxu0
    %v338 = vadd.f32 0.0, %v337
    %v339 = vpop.f32.mrf.mxu0
    %340 = vmatprep.mubr.f32.mxu0 0.0
    %341 = vmatmul.mubr.f32.gmra.mxu0 %v135
    %v342 = vpop.f32.mrf.mxu0
    %v343 = vadd.f32 0.0, %v342
    %v344 = vpop.f32.mrf.mxu0
    %345 = vmatprep.mubr.f32.mxu0 0.0
    %346 = vmatmul.mubr.f32.gmra.mxu0 %v138
    %v347 = vpop.f32.mrf.mxu0
    %v348 = vadd.f32 0.0, %v347
    %v349 = vpop.f32.mrf.mxu0
    %350 = vmatprep.mubr.f32.mxu0 0.0
    %351 = vmatmul.mubr.f32.gmra.mxu0 %v141
    %v352 = vpop.f32.mrf.mxu0
    %v353 = vadd.f32 0.0, %v352
    %v354 = vpop.f32.mrf.mxu0
    %355 = vmatprep.mubr.f32.mxu0 0.0
    %356 = vmatmul.mubr.f32.gmra.mxu0 %v144
    %v357 = vpop.f32.mrf.mxu0
    %v358 = vadd.f32 0.0, %v357
    %v359 = vpop.f32.mrf.mxu0
    %360 = vmatprep.mubr.f32.mxu0 0.0
    %361 = vmatmul.mubr.f32.gmra.mxu0 %v147
    %v362 = vpop.f32.mrf.mxu0
    %v363 = vadd.f32 0.0, %v362
    %v364 = vpop.f32.mrf.mxu0
    %365 = vmatprep.mubr.f32.mxu0 0.0
    %366 = vmatmul.mubr.f32.gmra.mxu0 %v150
    %v367 = vpop.f32.mrf.mxu0
    %v368 = vadd.f32 0.0, %v367
    %v369 = vpop.f32.mrf.mxu0
    %370 = vmatprep.mubr.f32.mxu0 0.0
    %371 = vmatmul.mubr.f32.gmra.mxu0 %v153
    %v372 = vpop.f32.mrf.mxu0
    %v373 = vadd.f32 0.0, %v372
    %v374 = vpop.f32.mrf.mxu0
    %375 = vmatprep.mubr.f32.mxu0 0.0
    %376 = vmatmul.mubr.f32.gmra.mxu0 %v156
    %v377 = vpop.f32.mrf.mxu0
    %v378 = vadd.f32 0.0, %v377
    %v379 = vpop.f32.mrf.mxu0
    %380 = vmatprep.mubr.f32.mxu0 0.0
    %381 = vmatmul.mubr.f32.gmra.mxu0 %v159
    %v382 = vpop.f32.mrf.mxu0
    %v383 = vadd.f32 0.0, %v382
    %v384 = vpop.f32.mrf.mxu0
    %385 = vdwg.mxu0
    %v386 = vmax.f32 %v228, 0.0
    %v387 = vmax.f32 %v233, 0.0
    %v388 = vmax.f32 %v238, 0.0
    %v389 = vmax.f32 %v243, 0.0
    %v390 = vmax.f32 %v248, 0.0
    %v391 = vmax.f32 %v253, 0.0
    %v392 = vmax.f32 %v258, 0.0
    %v393 = vmax.f32 %v263, 0.0
    %v394 = vmax.f32 %v268, 0.0
    %v395 = vmax.f32 %v273, 0.0
    %v396 = vmax.f32 %v278, 0.0
    %v397 = vmax.f32 %v283, 0.0
    %v398 = vmax.f32 %v288, 0.0
    %v399 = vmax.f32 %v293, 0.0
    %v400 = vmax.f32 %v298, 0.0
    %v401 = vmax.f32 %v303, 0.0
    %v402 = vmax.f32 %v308, 0.0
    %v403 = vmax.f32 %v313, 0.0
    %v404 = vmax.f32 %v318, 0.0
    %v405 = vmax.f32 %v323, 0.0
    %v406 = vmax.f32 %v328, 0.0
    %v407 = vmax.f32 %v333, 0.0
    %v408 = vmax.f32 %v338, 0.0
    %v409 = vmax.f32 %v343, 0.0
    %v410 = vmax.f32 %v348, 0.0
    %v411 = vmax.f32 %v353, 0.0
    %v412 = vmax.f32 %v358, 0.0
    %v413 = vmax.f32 %v363, 0.0
    %v414 = vmax.f32 %v368, 0.0
    %v415 = vmax.f32 %v373, 0.0
    %v416 = vmax.f32 %v378, 0.0
    %v417 = vmax.f32 %v383, 0.0
    %418 = vmatprep.subr.mxu0 0.0
    %419 = vmatpush1.msra.mxu0 %v62
    %420 = vmatprep.subr.mxu0 0.0
    %421 = vmatpush1.msra.mxu0 %v61
    %422 = vmatprep.subr.mxu0 0.0
    %423 = vmatpush1.msra.mxu0 %v60
    %424 = vmatprep.subr.mxu0 0.0
    %425 = vmatpush1.msra.mxu0 %v59
    %426 = vmatprep.subr.mxu0 0.0
    %427 = vmatpush1.msra.mxu0 %v58
    %428 = vmatprep.subr.mxu0 0.0
    %429 = vmatpush1.msra.mxu0 %v57
    %430 = vmatprep.subr.mxu0 0.0
    %431 = vmatpush1.msra.mxu0 %v56
    %432 = vmatprep.subr.mxu0 0.0
    %433 = vmatpush1.msra.mxu0 %v55
    %434 = vmatprep.subr.mxu0 0.0
    %435 = vmatpush1.msra.mxu0 %v54
    %436 = vmatprep.subr.mxu0 0.0
    %437 = vmatpush1.msra.mxu0 %v53
    %438 = vmatprep.subr.mxu0 0.0
    %439 = vmatpush1.msra.mxu0 %v52
    %440 = vmatprep.subr.mxu0 0.0
    %441 = vmatpush1.msra.mxu0 %v51
    %442 = vmatprep.subr.mxu0 0.0
    %443 = vmatpush1.msra.mxu0 %v50
    %444 = vmatprep.subr.mxu0 0.0
    %445 = vmatpush1.msra.mxu0 %v49
    %446 = vmatprep.subr.mxu0 0.0
    %447 = vmatpush1.msra.mxu0 %v48
    %448 = vmatprep.subr.mxu0 0.0
    %449 = vmatpush1.msra.mxu0 %v47
    %450 = vmatprep.subr.mxu0 0.0
    %451 = vmatpush2.msra.mxu0 0.0
    %452 = vmatprep.subr.mxu0 0.0
    %453 = vmatpush2.msra.mxu0 0.0
    %454 = vmatprep.subr.mxu0 0.0
    %455 = vmatpush2.msra.mxu0 0.0
    %456 = vmatprep.subr.mxu0 0.0
    %457 = vmatpush2.msra.mxu0 0.0
    %458 = vmatprep.subr.mxu0 0.0
    %459 = vmatpush2.msra.mxu0 0.0
    %460 = vmatprep.subr.mxu0 0.0
    %461 = vmatpush2.msra.mxu0 0.0
    %462 = vmatprep.subr.mxu0 0.0
    %463 = vmatpush2.msra.mxu0 0.0
    %464 = vmatprep.subr.mxu0 0.0
    %465 = vmatpush2.msra.mxu0 0.0
    %466 = vmatprep.subr.mxu0 0.0
    %467 = vmatpush2.msra.mxu0 0.0
    %468 = vmatprep.subr.mxu0 0.0
    %469 = vmatpush2.msra.mxu0 0.0
    %470 = vmatprep.subr.mxu0 0.0
    %471 = vmatpush2.msra.mxu0 0.0
    %472 = vmatprep.subr.mxu0 0.0
    %473 = vmatpush2.msra.mxu0 0.0
    %474 = vmatprep.subr.mxu0 0.0
    %475 = vmatpush2.msra.mxu0 0.0
    %476 = vmatprep.subr.mxu0 0.0
    %477 = vmatpush2.msra.mxu0 0.0
    %478 = vmatprep.subr.mxu0 0.0
    %479 = vmatpush2.msra.mxu0 0.0
    %480 = vmatprep.subr.mxu0 0.0
    %481 = vmatpush2.msra.mxu0 0.0
    %482 = vmatprep.mubr.f32.mxu0 0.0
    %483 = vmatmul.mubr.f32.gmra.mxu0 %v386
    %v484 = vpop.f32.mrf.mxu0
    %v485 = vadd.f32 0.0, %v484
    %v486 = vpop.f32.mrf.mxu0
    %487 = vmatprep.mubr.f32.mxu0 0.0
    %488 = vmatmul.mubr.f32.gmra.mxu0 %v387
    %v489 = vpop.f32.mrf.mxu0
    %v490 = vadd.f32 0.0, %v489
    %v491 = vpop.f32.mrf.mxu0
    %492 = vmatprep.mubr.f32.mxu0 0.0
    %493 = vmatmul.mubr.f32.gmra.mxu0 %v388
    %v494 = vpop.f32.mrf.mxu0
    %v495 = vadd.f32 0.0, %v494
    %v496 = vpop.f32.mrf.mxu0
    %497 = vmatprep.mubr.f32.mxu0 0.0
    %498 = vmatmul.mubr.f32.gmra.mxu0 %v389
    %v499 = vpop.f32.mrf.mxu0
    %v500 = vadd.f32 0.0, %v499
    %v501 = vpop.f32.mrf.mxu0
    %502 = vmatprep.mubr.f32.mxu0 0.0
    %503 = vmatmul.mubr.f32.gmra.mxu0 %v390
    %v504 = vpop.f32.mrf.mxu0
    %v505 = vadd.f32 0.0, %v504
    %v506 = vpop.f32.mrf.mxu0
    %507 = vmatprep.mubr.f32.mxu0 0.0
    %508 = vmatmul.mubr.f32.gmra.mxu0 %v391
    %v509 = vpop.f32.mrf.mxu0
    %v510 = vadd.f32 0.0, %v509
    %v511 = vpop.f32.mrf.mxu0
    %512 = vmatprep.mubr.f32.mxu0 0.0
    %513 = vmatmul.mubr.f32.gmra.mxu0 %v392
    %v514 = vpop.f32.mrf.mxu0
    %v515 = vadd.f32 0.0, %v514
    %v516 = vpop.f32.mrf.mxu0
    %517 = vmatprep.mubr.f32.mxu0 0.0
    %518 = vmatmul.mubr.f32.gmra.mxu0 %v393
    %v519 = vpop.f32.mrf.mxu0
    %v520 = vadd.f32 0.0, %v519
    %v521 = vpop.f32.mrf.mxu0
    %522 = vmatprep.mubr.f32.mxu0 0.0
    %523 = vmatmul.mubr.f32.gmra.mxu0 %v394
    %v524 = vpop.f32.mrf.mxu0
    %v525 = vadd.f32 0.0, %v524
    %v526 = vpop.f32.mrf.mxu0
    %527 = vmatprep.mubr.f32.mxu0 0.0
    %528 = vmatmul.mubr.f32.gmra.mxu0 %v395
    %v529 = vpop.f32.mrf.mxu0
    %v530 = vadd.f32 0.0, %v529
    %v531 = vpop.f32.mrf.mxu0
    %532 = vmatprep.mubr.f32.mxu0 0.0
    %533 = vmatmul.mubr.f32.gmra.mxu0 %v396
    %v534 = vpop.f32.mrf.mxu0
    %v535 = vadd.f32 0.0, %v534
    %v536 = vpop.f32.mrf.mxu0
    %537 = vmatprep.mubr.f32.mxu0 0.0
    %538 = vmatmul.mubr.f32.gmra.mxu0 %v397
    %v539 = vpop.f32.mrf.mxu0
    %v540 = vadd.f32 0.0, %v539
    %v541 = vpop.f32.mrf.mxu0
    %542 = vmatprep.mubr.f32.mxu0 0.0
    %543 = vmatmul.mubr.f32.gmra.mxu0 %v398
    %v544 = vpop.f32.mrf.mxu0
    %v545 = vadd.f32 0.0, %v544
    %v546 = vpop.f32.mrf.mxu0
    %547 = vmatprep.mubr.f32.mxu0 0.0
    %548 = vmatmul.mubr.f32.gmra.mxu0 %v399
    %v549 = vpop.f32.mrf.mxu0
    %v550 = vadd.f32 0.0, %v549
    %v551 = vpop.f32.mrf.mxu0
    %552 = vmatprep.mubr.f32.mxu0 0.0
    %553 = vmatmul.mubr.f32.gmra.mxu0 %v400
    %v554 = vpop.f32.mrf.mxu0
    %v555 = vadd.f32 0.0, %v554
    %v556 = vpop.f32.mrf.mxu0
    %557 = vmatprep.mubr.f32.mxu0 0.0
    %558 = vmatmul.mubr.f32.gmra.mxu0 %v401
    %v559 = vpop.f32.mrf.mxu0
    %v560 = vadd.f32 0.0, %v559
    %v561 = vpop.f32.mrf.mxu0
    %562 = vmatprep.mubr.f32.mxu0 0.0
    %563 = vmatmul.mubr.f32.gmra.mxu0 %v402
    %v564 = vpop.f32.mrf.mxu0
    %v565 = vadd.f32 0.0, %v564
    %v566 = vpop.f32.mrf.mxu0
    %567 = vmatprep.mubr.f32.mxu0 0.0
    %568 = vmatmul.mubr.f32.gmra.mxu0 %v403
    %v569 = vpop.f32.mrf.mxu0
    %v570 = vadd.f32 0.0, %v569
    %v571 = vpop.f32.mrf.mxu0
    %572 = vmatprep.mubr.f32.mxu0 0.0
    %573 = vmatmul.mubr.f32.gmra.mxu0 %v404
    %v574 = vpop.f32.mrf.mxu0
    %v575 = vadd.f32 0.0, %v574
    %v576 = vpop.f32.mrf.mxu0
    %577 = vmatprep.mubr.f32.mxu0 0.0
    %578 = vmatmul.mubr.f32.gmra.mxu0 %v405
    %v579 = vpop.f32.mrf.mxu0
    %v580 = vadd.f32 0.0, %v579
    %v581 = vpop.f32.mrf.mxu0
    %582 = vmatprep.mubr.f32.mxu0 0.0
    %583 = vmatmul.mubr.f32.gmra.mxu0 %v406
    %v584 = vpop.f32.mrf.mxu0
    %v585 = vadd.f32 0.0, %v584
    %v586 = vpop.f32.mrf.mxu0
    %587 = vmatprep.mubr.f32.mxu0 0.0
    %588 = vmatmul.mubr.f32.gmra.mxu0 %v407
    %v589 = vpop.f32.mrf.mxu0
    %v590 = vadd.f32 0.0, %v589
    %v591 = vpop.f32.mrf.mxu0
    %592 = vmatprep.mubr.f32.mxu0 0.0
    %593 = vmatmul.mubr.f32.gmra.mxu0 %v408
    %v594 = vpop.f32.mrf.mxu0
    %v595 = vadd.f32 0.0, %v594
    %v596 = vpop.f32.mrf.mxu0
    %597 = vmatprep.mubr.f32.mxu0 0.0
    %598 = vmatmul.mubr.f32.gmra.mxu0 %v409
    %v599 = vpop.f32.mrf.mxu0
    %v600 = vadd.f32 0.0, %v599
    %v601 = vpop.f32.mrf.mxu0
    %602 = vmatprep.mubr.f32.mxu0 0.0
    %603 = vmatmul.mubr.f32.gmra.mxu0 %v410
    %v604 = vpop.f32.mrf.mxu0
    %v605 = vadd.f32 0.0, %v604
    %v606 = vpop.f32.mrf.mxu0
    %607 = vmatprep.mubr.f32.mxu0 0.0
    %608 = vmatmul.mubr.f32.gmra.mxu0 %v411
    %v609 = vpop.f32.mrf.mxu0
    %v610 = vadd.f32 0.0, %v609
    %v611 = vpop.f32.mrf.mxu0
    %612 = vmatprep.mubr.f32.mxu0 0.0
    %613 = vmatmul.mubr.f32.gmra.mxu0 %v412
    %v614 = vpop.f32.mrf.mxu0
    %v615 = vadd.f32 0.0, %v614
    %v616 = vpop.f32.mrf.mxu0
    %617 = vmatprep.mubr.f32.mxu0 0.0
    %618 = vmatmul.mubr.f32.gmra.mxu0 %v413
    %v619 = vpop.f32.mrf.mxu0
    %v620 = vadd.f32 0.0, %v619
    %v621 = vpop.f32.mrf.mxu0
    %622 = vmatprep.mubr.f32.mxu0 0.0
    %623 = vmatmul.mubr.f32.gmra.mxu0 %v414
    %v624 = vpop.f32.mrf.mxu0
    %v625 = vadd.f32 0.0, %v624
    %v626 = vpop.f32.mrf.mxu0
    %627 = vmatprep.mubr.f32.mxu0 0.0
    %628 = vmatmul.mubr.f32.gmra.mxu0 %v415
    %v629 = vpop.f32.mrf.mxu0
    %v630 = vadd.f32 0.0, %v629
    %v631 = vpop.f32.mrf.mxu0
    %632 = vmatprep.mubr.f32.mxu0 0.0
    %633 = vmatmul.mubr.f32.gmra.mxu0 %v416
    %v634 = vpop.f32.mrf.mxu0
    %v635 = vadd.f32 0.0, %v634
    %v636 = vpop.f32.mrf.mxu0
    %637 = vmatprep.mubr.f32.mxu0 0.0
    %638 = vmatmul.mubr.f32.gmra.mxu0 %v417
    %v639 = vpop.f32.mrf.mxu0
    %v640 = vadd.f32 0.0, %v639
    %v641 = vpop.f32.mrf.mxu0
    %642 = vdwg.mxu0
    %v643 = vmax.f32 %v485, 0.0
    %v644 = vmax.f32 %v490, 0.0
    %v645 = vmax.f32 %v495, 0.0
    %v646 = vmax.f32 %v500, 0.0
    %v647 = vmax.f32 %v505, 0.0
    %v648 = vmax.f32 %v510, 0.0
    %v649 = vmax.f32 %v515, 0.0
    %v650 = vmax.f32 %v520, 0.0
    %v651 = vmax.f32 %v525, 0.0
    %v652 = vmax.f32 %v530, 0.0
    %v653 = vmax.f32 %v535, 0.0
    %v654 = vmax.f32 %v540, 0.0
    %v655 = vmax.f32 %v545, 0.0
    %v656 = vmax.f32 %v550, 0.0
    %v657 = vmax.f32 %v555, 0.0
    %v658 = vmax.f32 %v560, 0.0
    %v659 = vmax.f32 %v565, 0.0
    %v660 = vmax.f32 %v570, 0.0
    %v661 = vmax.f32 %v575, 0.0
    %v662 = vmax.f32 %v580, 0.0
    %v663 = vmax.f32 %v585, 0.0
    %v664 = vmax.f32 %v590, 0.0
    %v665 = vmax.f32 %v595, 0.0
    %v666 = vmax.f32 %v600, 0.0
    %v667 = vmax.f32 %v605, 0.0
    %v668 = vmax.f32 %v610, 0.0
    %v669 = vmax.f32 %v615, 0.0
    %v670 = vmax.f32 %v620, 0.0
    %v671 = vmax.f32 %v625, 0.0
    %v672 = vmax.f32 %v630, 0.0
    %v673 = vmax.f32 %v635, 0.0
    %v674 = vmax.f32 %v640, 0.0
    %675 = vmatprep.subr.mxu0 0.0
    %676 = vmatpush1.xpose.msra.mxu0 %v658
    %677 = vmatprep.subr.mxu0 0.0
    %678 = vmatpush1.xpose.msra.mxu0 %v657
    %679 = vmatprep.subr.mxu0 0.0
    %680 = vmatpush1.xpose.msra.mxu0 %v656
    %681 = vmatprep.subr.mxu0 0.0
    %682 = vmatpush1.xpose.msra.mxu0 %v655
    %683 = vmatprep.subr.mxu0 0.0
    %684 = vmatpush1.xpose.msra.mxu0 %v654
    %685 = vmatprep.subr.mxu0 0.0
    %686 = vmatpush1.xpose.msra.mxu0 %v653
    %687 = vmatprep.subr.mxu0 0.0
    %688 = vmatpush1.xpose.msra.mxu0 %v652
    %689 = vmatprep.subr.mxu0 0.0
    %690 = vmatpush1.xpose.msra.mxu0 %v651
    %691 = vmatprep.subr.mxu0 0.0
    %692 = vmatpush1.xpose.msra.mxu0 %v650
    %693 = vmatprep.subr.mxu0 0.0
    %694 = vmatpush1.xpose.msra.mxu0 %v649
    %695 = vmatprep.subr.mxu0 0.0
    %696 = vmatpush1.xpose.msra.mxu0 %v648
    %697 = vmatprep.subr.mxu0 0.0
    %698 = vmatpush1.xpose.msra.mxu0 %v647
    %699 = vmatprep.subr.mxu0 0.0
    %700 = vmatpush1.xpose.msra.mxu0 %v646
    %701 = vmatprep.subr.mxu0 0.0
    %702 = vmatpush1.xpose.msra.mxu0 %v645
    %703 = vmatprep.subr.mxu0 0.0
    %704 = vmatpush1.xpose.msra.mxu0 %v644
    %705 = vmatprep.subr.mxu0 0.0
    %706 = vmatpush1.xpose.msra.mxu0 %v643
    %707 = vmatprep.subr.mxu0 0.0
    %708 = vmatpush2.xpose.msra.mxu0 %v674
    %709 = vmatprep.subr.mxu0 0.0
    %710 = vmatpush2.xpose.msra.mxu0 %v673
    %711 = vmatprep.subr.mxu0 0.0
    %712 = vmatpush2.xpose.msra.mxu0 %v672
    %713 = vmatprep.subr.mxu0 0.0
    %714 = vmatpush2.xpose.msra.mxu0 %v671
    %715 = vmatprep.subr.mxu0 0.0
    %716 = vmatpush2.xpose.msra.mxu0 %v670
    %717 = vmatprep.subr.mxu0 0.0
    %718 = vmatpush2.xpose.msra.mxu0 %v669
    %719 = vmatprep.subr.mxu0 0.0
    %720 = vmatpush2.xpose.msra.mxu0 %v668
    %721 = vmatprep.subr.mxu0 0.0
    %722 = vmatpush2.xpose.msra.mxu0 %v667
    %723 = vmatprep.subr.mxu0 0.0
    %724 = vmatpush2.xpose.msra.mxu0 %v666
    %725 = vmatprep.subr.mxu0 0.0
    %726 = vmatpush2.xpose.msra.mxu0 %v665
    %727 = vmatprep.subr.mxu0 0.0
    %728 = vmatpush2.xpose.msra.mxu0 %v664
    %729 = vmatprep.subr.mxu0 0.0
    %730 = vmatpush2.xpose.msra.mxu0 %v663
    %731 = vmatprep.subr.mxu0 0.0
    %732 = vmatpush2.xpose.msra.mxu0 %v662
    %733 = vmatprep.subr.mxu0 0.0
    %734 = vmatpush2.xpose.msra.mxu0 %v661
    %735 = vmatprep.subr.mxu0 0.0
    %736 = vmatpush2.xpose.msra.mxu0 %v660
    %737 = vmatprep.subr.mxu0 0.0
    %738 = vmatpush2.xpose.msra.mxu0 %v659
    %739 = vmatprep.mubr.f32.mxu0 0.0
    %740 = vmatmul.mubr.f32.gmra.mxu0 %v63
    %v741 = vpop.f32.mrf.mxu0
    %v742 = vadd.f32 0.0, %v741
    %v743 = vpop.f32.mrf.mxu0
    %v744 = vadd.f32 0.0, %v743
    %745 = vdwg.mxu0
    %v748 = vcombine.low %v742, %v744
    %v750 = vunpack.c.l.s4 1966171168
    %v751 = vunpack.c.0.s8 %v750
    %v752 = vlaneseq
    %v753 = vshrl.u32 %v752, 7
    %v754 = vsub.s32 %v751, %v753
    %v755 = vrot.slane %v748, %v754
    %v757 = vunpack.c.l.s4 1966171168
    %v758 = vunpack.c.0.s8 %v757
    %v759 = vlaneseq
    %v760 = vshrl.u32 %v759, 7
    %v761 = vsub.s32 %v758, %v760
    %v762 = vrot.slane %v755, %v761
    %v764 = vlaneseq
    %vm765 = vcmp.ge.s32.totalorder %v764, 0
    %vm766 = vcmp.lt.s32.totalorder %v764, 256
    %vm767 = vmand %vm765, %vm766
    %768 = vst.msk [vmem:[#allocation2] sm:$0x3] %vm767, %v762
    // Predicated region
    $region10: #{tpu_custom_call.1} parent=1 // pred_check
      _
    $region11: #{tpu_custom_call.1} parent=1 // pred_check_branch
      %770 = sbr.rel (0) target = $region13
    $region12: #{tpu_custom_call.1} parent=1 // pred_region
      %s772 = ssub.s32 32, 32
      %773 = vsyncadd [#allocation3], %s772
      %s775 = sshll.u32 [#allocation2], 4
      %s776 = int_to_ptr.vmem [resolvable:$true] %s775
      %778 = dma.vmem_to_hbm [thread:$0]  %s776, 32, %s2, [#allocation3]
    $region13: #{tpu_custom_call.1} parent=1 // pred_fallthru
      _
    // Predicated region
    $region14: #{tpu_custom_call.1} parent=1 // pred_check
      _
    $region15: #{tpu_custom_call.1} parent=1 // pred_check_branch
      %780 = sbr.rel (0) target = $region17
    $region16: #{tpu_custom_call.1} parent=1 // pred_region
      %781 = dma.done [#allocation3], 32
    $region17: #{tpu_custom_call.1} parent=1 // pred_fallthru
      _
    %782 = vsyncpa [#allocation3], 1

</llo_original>
